<compile_context>
chip_gen: v5e
topology: v5e:2x2
jax: 0.10.0
libtpu: 0.0.40
codegen_flags: <defaults>
</compile_context>

<pallas_src>
import jax
import jax.numpy as jnp
from jax import lax
from jax.experimental import pallas as pl
from jax.experimental.pallas import tpu as pltpu


TB = 8            # batch rows per grid step (8 sublanes -> unmasked stores)
GATHER_DEPTH = 8  # in-flight row DMAs for the token-embedding gather


# ---------------------------------------------------------------------------
# Fused kernel: embedding gather + mask + masked-mean pool + pooler + classifier
# ---------------------------------------------------------------------------
def _fused_bert_kernel(tok_ids_ref,   # SMEM [B_pad*S] int32 (scalar prefetch)
                       tok_emb_hbm,   # ANY  [V, H] f32 (stays in HBM, gathered)
                       vl_ref,        # VMEM [TB, 1] int32
                       seg_ids_ref,   # VMEM [TB, S] int32 (lane-dense)
                       seg_emb_ref,   # VMEM [G, H] f32
                       wp_ref,        # VMEM [H, H] bf16   (pooler weight)
                       bp_ref,        # VMEM [1, H] f32    (pooler bias)
                       wc_ref,        # VMEM [H, CP] bf16  (classifier weight, lane-padded)
                       bc_ref,        # VMEM [1, CP] f32   (classifier bias, lane-padded)
                       out_ref,       # VMEM [TB, CP] f32  (lane-dense logits)
                       emb_buf,       # VMEM scratch [TB*S, H] f32
                       sem):          # DMA semaphore
    tb, S = seg_ids_ref.shape
    G, H = seg_emb_ref.shape
    NTOK = tb * S
    base = pl.program_id(0) * NTOK

    # ---- token-embedding gather: HBM rows -> VMEM, depth-pipelined DMAs ---
    def row_copy(n):
        tok = tok_ids_ref[base + n]
        return pltpu.make_async_copy(tok_emb_hbm.at[pl.ds(tok, 1), :],
                                     emb_buf.at[pl.ds(n, 1), :],
                                     sem)

    depth = min(GATHER_DEPTH, NTOK)
    for d in range(depth):                 # prime the DMA window
        row_copy(d).start()

    def gather_body(n, carry):
        @pl.when(n + depth < NTOK)
        def _():
            row_copy(n + depth).start()    # keep `depth` copies in flight
        row_copy(n).wait()
        return carry

    lax.fori_loop(0, NTOK, gather_body, 0)

    # ---- attention mask: single broadcast compare against an S-iota -------
    vl = vl_ref[...]                                                  # (TB, 1)
    col = lax.broadcasted_iota(jnp.int32, (tb, S), 1)
    mask = (col < vl).astype(jnp.float32)                             # (TB, S)
    denom = jnp.maximum(jnp.sum(mask, axis=1, keepdims=True), 1.0)    # (TB, 1)

    # ---- masked sum of gathered token embeddings on the MXU ---------------
    # pool[b, n] = 1 iff flat token n belongs to tile row b and is valid.
    bat = lax.broadcasted_iota(jnp.int32, (tb, NTOK), 0)
    pos = lax.broadcasted_iota(jnp.int32, (tb, NTOK), 1)
    rel = pos - bat * S
    pool = jnp.logical_and(rel >= 0,
                           jnp.logical_and(rel < S, rel < vl)).astype(jnp.float32)
    summed = jnp.dot(pool, emb_buf[...],
                     preferred_element_type=jnp.float32)              # (TB, H)

    # ---- segment embeddings: per-row segment counts @ tiny table ----------
    # masked_sum(seg_emb[seg_ids]) == sum_g count_g(valid) * seg_emb[g]
    seg = seg_ids_ref[...]
    for g in range(G):                      # G is tiny (2) -> static unroll
        cnt = jnp.sum(mask * (seg == g).astype(jnp.float32),
                      axis=1, keepdims=True)                          # (TB, 1)
        summed = summed + cnt * seg_emb_ref[g:g + 1, :]               # (TB, H)

    mean = summed * pl.reciprocal(denom, approx=False)                # (TB, H)

    # ---- BERT-style pooler: dense + tanh -----------------------------------
    pooled = jnp.tanh(
        jnp.dot(mean.astype(jnp.bfloat16), wp_ref[...],
                preferred_element_type=jnp.float32) + bp_ref[...])    # (TB, H)

    # ---- classifier head (dropout == identity at inference) ----------------
    out_ref[...] = (
        jnp.dot(pooled.astype(jnp.bfloat16), wc_ref[...],
                preferred_element_type=jnp.float32) + bc_ref[...])    # (TB, CP)


# ---------------------------------------------------------------------------
# One-time weight prep (hoisted out of the per-step forward)
# ---------------------------------------------------------------------------
def preprocess_params(params):
    H = params["w_pool"].shape[0]
    C = params["w_cls"].shape[1]
    CP = ((C + 127) // 128) * 128           # lane-dense / MXU-friendly padded N
    return {
        # Token table stays f32 and lives in HBM (gathered row-by-row).
        # At real BERT sizes it can be stored bf16 to halve the gather bytes.
        "tok_emb": params["tok_emb"].astype(jnp.float32),
        "seg_emb": params["seg_emb"].astype(jnp.float32),
        "w_pool":  params["w_pool"].astype(jnp.bfloat16),
        "b_pool":  params["b_pool"].reshape(1, H).astype(jnp.float32),
        "w_cls":   jnp.zeros((H, CP), jnp.bfloat16).at[:, :C].set(
            params["w_cls"].astype(jnp.bfloat16)),
        "b_cls":   jnp.zeros((1, CP), jnp.float32).at[0, :C].set(
            params["b_cls"].astype(jnp.float32)),
        "num_classes": int(C),
    }


# ---------------------------------------------------------------------------
# Forward wrapper
# ---------------------------------------------------------------------------
def bert_classifier_forward(prepped, token_ids, valid_length, segment_ids):
    B, S = token_ids.shape
    V, H = prepped["tok_emb"].shape
    G = prepped["seg_emb"].shape[0]
    CP = prepped["w_cls"].shape[1]
    C = prepped["num_classes"]

    B_pad = ((B + TB - 1) // TB) * TB
    NTOK = TB * S

    tok_ids = jnp.zeros((B_pad, S), jnp.int32).at[:B].set(token_ids.astype(jnp.int32))
    seg_ids = jnp.zeros((B_pad, S), jnp.int32).at[:B].set(segment_ids.astype(jnp.int32))
    vl = jnp.zeros((B_pad, 1), jnp.int32).at[:B, 0].set(valid_length.astype(jnp.int32))
    tok_ids_flat = tok_ids.reshape(B_pad * S)

    logits_padded = pl.pallas_call(
        _fused_bert_kernel,
        out_shape=jax.ShapeDtypeStruct((B_pad, CP), jnp.float32),
        grid_spec=pltpu.PrefetchScalarGridSpec(
            num_scalar_prefetch=1,                     # token ids -> SMEM
            grid=(B_pad // TB,),                       # tiled over batch
            in_specs=[
                pl.BlockSpec(memory_space=pl.ANY),            # token table in HBM
                pl.BlockSpec((TB, 1), lambda i, tok: (i, 0)), # valid_length
                pl.BlockSpec((TB, S), lambda i, tok: (i, 0)), # segment ids (lane-dense)
                pl.BlockSpec((G, H), lambda i, tok: (0, 0)),  # segment table
                pl.BlockSpec((H, H), lambda i, tok: (0, 0)),  # pooler weight
                pl.BlockSpec((1, H), lambda i, tok: (0, 0)),  # pooler bias
                pl.BlockSpec((H, CP), lambda i, tok: (0, 0)), # classifier weight (padded)
                pl.BlockSpec((1, CP), lambda i, tok: (0, 0)), # classifier bias (padded)
            ],
            out_specs=pl.BlockSpec((TB, CP), lambda i, tok: (i, 0)),
            scratch_shapes=[
                pltpu.VMEM((NTOK, H), jnp.float32),    # gathered token embeddings
                pltpu.SemaphoreType.DMA,               # gather DMA semaphore
            ],
        ),
        compiler_params=pltpu.CompilerParams(
            dimension_semantics=("parallel",),         # batch tiles split across TCs
            # Size to resident tiles (weights + per-tile activations + double
            # buffers) with headroom; raise at real BERT shapes.
            vmem_limit_bytes=32 * 1024 * 1024,
        ),
    )(tok_ids_flat, prepped["tok_emb"], vl, seg_ids, prepped["seg_emb"],
      prepped["w_pool"], prepped["b_pool"], prepped["w_cls"], prepped["b_cls"])

    return logits_padded[:B, :C]


# ---------------------------------------------------------------------------
# Pure-JAX reference (f32) for correctness check
# ---------------------------------------------------------------------------
def _reference_forward(params, token_ids, valid_length, segment_ids):
    B, S = token_ids.shape
    tok_e = jnp.take(params["tok_emb"], token_ids, axis=0)
    seg_e = jnp.take(params["seg_emb"], segment_ids, axis=0)
    emb = (tok_e + seg_e).astype(jnp.float32)
    col = jnp.arange(S)[None, :]
    mask = (col < valid_length[:, None]).astype(jnp.float32)
    summed = jnp.sum(emb * mask[:, :, None], axis=1)
    denom = jnp.maximum(jnp.sum(mask, axis=1, keepdims=True), 1.0)
    mean = summed / denom
    pooled = jnp.tanh(mean @ params["w_pool"] + params["b_pool"][None, :])
    return pooled @ params["w_cls"] + params["b_cls"][None, :]


# ---------------------------------------------------------------------------
# Deterministic parameter init + demo
# ---------------------------------------------------------------------------
def init_params(key, vocab=64, n_segments=2, hidden=32, num_classes=7):
    ks = jax.random.split(key, 6)
    scale = 0.02
    return {
        "tok_emb": scale * jax.random.normal(ks[0], (vocab, hidden), jnp.float32),
        "seg_emb": scale * jax.random.normal(ks[1], (n_segments, hidden), jnp.float32),
        "w_pool":  scale * jax.random.normal(ks[2], (hidden, hidden), jnp.float32),
        "b_pool":  jnp.zeros((hidden,), jnp.float32),
        "w_cls":   scale * jax.random.normal(ks[3], (hidden, num_classes), jnp.float32),
        "b_cls":   jnp.zeros((num_classes,), jnp.float32),
    }


if __name__ == "__main__":
    key = jax.random.PRNGKey(0)
    pkey, dkey1, dkey2 = jax.random.split(key, 3)

    B, S, H, C, V = 2, 8, 32, 7, 64
    params = init_params(pkey, vocab=V, n_segments=2, hidden=H, num_classes=C)
    prepped = preprocess_params(params)          # one-time weight prep

    token_ids = jax.random.randint(dkey1, (B, S), 0, V, dtype=jnp.int32)
    segment_ids = jax.random.randint(dkey2, (B, S), 0, 2, dtype=jnp.int32)
    valid_length = jnp.array([5, 8], dtype=jnp.int32)

    logits = bert_classifier_forward(prepped, token_ids, valid_length, segment_ids)
    logits = jax.block_until_ready(logits)

    assert logits.shape == (B, C), logits.shape
    assert logits.dtype == jnp.float32
    assert bool(jnp.all(jnp.isfinite(logits)))

    ref = _reference_forward(params, token_ids, valid_length, segment_ids)
    # tolerance absorbs bf16 pooler/classifier matmul operands (pooling itself
    # is exact f32 with an exact reciprocal now)
    assert bool(jnp.allclose(logits, ref, rtol=5e-2, atol=1e-5)), (logits, ref)

    print("KERNEL_OK")
</pallas_src>

<mosaic_0001>
module attributes {stable_mosaic.version = 11 : i64} {
  func.func @_fused_bert_kernel(%arg0: i32, %arg1: memref<64xi32, #tpu.memory_space<smem>>, %arg2: memref<64x32xf32, #tpu.memory_space<any>>, %arg3: memref<8x1xi32, #tpu.memory_space<vmem>>, %arg4: memref<8x8xi32, #tpu.memory_space<vmem>>, %arg5: memref<2x32xf32, #tpu.memory_space<vmem>>, %arg6: memref<32x32xbf16, #tpu.memory_space<vmem>>, %arg7: memref<1x32xf32, #tpu.memory_space<vmem>>, %arg8: memref<32x128xbf16, #tpu.memory_space<vmem>>, %arg9: memref<1x128xf32, #tpu.memory_space<vmem>>, %arg10: memref<8x128xf32, #tpu.memory_space<vmem>>, %arg11: memref<64x32xf32, #tpu.memory_space<vmem>>, %arg12: memref<!tpu.dma_semaphore, #tpu.memory_space<semaphore_mem>>) attributes {dimension_semantics = [#tpu.dimension_semantics<parallel>], iteration_bounds = array<i64: 1>, scalar_prefetch = 1 : i64, scratch_operands = 2 : i64, tpu.core_type = #tpu.core_type<tc>, window_params = [{}, {transform_indices = @transform_1, window_bounds = array<i64: 8, 1>}, {transform_indices = @transform_2, window_bounds = array<i64: 8, 8>}, {pipeline_mode = #tpu.pipeline_mode<synchronous>, transform_indices = @transform_3, window_bounds = array<i64: 2, 32>}, {pipeline_mode = #tpu.pipeline_mode<synchronous>, transform_indices = @transform_4, window_bounds = array<i64: 32, 32>}, {pipeline_mode = #tpu.pipeline_mode<synchronous>, transform_indices = @transform_5, window_bounds = array<i64: 1, 32>}, {pipeline_mode = #tpu.pipeline_mode<synchronous>, transform_indices = @transform_6, window_bounds = array<i64: 32, 128>}, {pipeline_mode = #tpu.pipeline_mode<synchronous>, transform_indices = @transform_7, window_bounds = array<i64: 1, 128>}, {transform_indices = @transform_8, window_bounds = array<i64: 8, 128>}]} {
    %c64_i32 = arith.constant 64 : i32
    %0 = arith.muli %arg0, %c64_i32 : i32
    %c0_i32 = arith.constant 0 : i32
    %1 = arith.addi %0, %c0_i32 : i32
    %2 = arith.index_cast %1 : i32 to index
    %3 = memref.load %arg1[%2] : memref<64xi32, #tpu.memory_space<smem>>
    %c0_i32_0 = arith.constant 0 : i32
    %4 = tpu.memref_slice %arg2[%3, %c0_i32_0] : memref<64x32xf32, #tpu.memory_space<any>> -> memref<1x32xf32, #tpu.memory_space<any>>
    %c0_i32_1 = arith.constant 0 : i32
    %c0_i32_2 = arith.constant 0 : i32
    %5 = tpu.memref_slice %arg11[%c0_i32_1, %c0_i32_2] : memref<64x32xf32, #tpu.memory_space<vmem>> -> memref<1x32xf32, #tpu.memory_space<vmem>>
    tpu.enqueue_dma source(%4 : memref<1x32xf32, #tpu.memory_space<any>>) target(%5 : memref<1x32xf32, #tpu.memory_space<vmem>>) target_semaphore(%arg12 : memref<!tpu.dma_semaphore, #tpu.memory_space<semaphore_mem>>)
    %c1_i32 = arith.constant 1 : i32
    %6 = arith.addi %0, %c1_i32 : i32
    %7 = arith.index_cast %6 : i32 to index
    %8 = memref.load %arg1[%7] : memref<64xi32, #tpu.memory_space<smem>>
    %c0_i32_3 = arith.constant 0 : i32
    %9 = tpu.memref_slice %arg2[%8, %c0_i32_3] : memref<64x32xf32, #tpu.memory_space<any>> -> memref<1x32xf32, #tpu.memory_space<any>>
    %c1_i32_4 = arith.constant 1 : i32
    %c0_i32_5 = arith.constant 0 : i32
    %10 = tpu.memref_slice %arg11[%c1_i32_4, %c0_i32_5] : memref<64x32xf32, #tpu.memory_space<vmem>> -> memref<1x32xf32, #tpu.memory_space<vmem>>
    tpu.enqueue_dma source(%9 : memref<1x32xf32, #tpu.memory_space<any>>) target(%10 : memref<1x32xf32, #tpu.memory_space<vmem>>) target_semaphore(%arg12 : memref<!tpu.dma_semaphore, #tpu.memory_space<semaphore_mem>>)
    %c2_i32 = arith.constant 2 : i32
    %11 = arith.addi %0, %c2_i32 : i32
    %12 = arith.index_cast %11 : i32 to index
    %13 = memref.load %arg1[%12] : memref<64xi32, #tpu.memory_space<smem>>
    %c0_i32_6 = arith.constant 0 : i32
    %14 = tpu.memref_slice %arg2[%13, %c0_i32_6] : memref<64x32xf32, #tpu.memory_space<any>> -> memref<1x32xf32, #tpu.memory_space<any>>
    %c2_i32_7 = arith.constant 2 : i32
    %c0_i32_8 = arith.constant 0 : i32
    %15 = tpu.memref_slice %arg11[%c2_i32_7, %c0_i32_8] : memref<64x32xf32, #tpu.memory_space<vmem>> -> memref<1x32xf32, #tpu.memory_space<vmem>>
    tpu.enqueue_dma source(%14 : memref<1x32xf32, #tpu.memory_space<any>>) target(%15 : memref<1x32xf32, #tpu.memory_space<vmem>>) target_semaphore(%arg12 : memref<!tpu.dma_semaphore, #tpu.memory_space<semaphore_mem>>)
    %c3_i32 = arith.constant 3 : i32
    %16 = arith.addi %0, %c3_i32 : i32
    %17 = arith.index_cast %16 : i32 to index
    %18 = memref.load %arg1[%17] : memref<64xi32, #tpu.memory_space<smem>>
    %c0_i32_9 = arith.constant 0 : i32
    %19 = tpu.memref_slice %arg2[%18, %c0_i32_9] : memref<64x32xf32, #tpu.memory_space<any>> -> memref<1x32xf32, #tpu.memory_space<any>>
    %c3_i32_10 = arith.constant 3 : i32
    %c0_i32_11 = arith.constant 0 : i32
    %20 = tpu.memref_slice %arg11[%c3_i32_10, %c0_i32_11] : memref<64x32xf32, #tpu.memory_space<vmem>> -> memref<1x32xf32, #tpu.memory_space<vmem>>
    tpu.enqueue_dma source(%19 : memref<1x32xf32, #tpu.memory_space<any>>) target(%20 : memref<1x32xf32, #tpu.memory_space<vmem>>) target_semaphore(%arg12 : memref<!tpu.dma_semaphore, #tpu.memory_space<semaphore_mem>>)
    %c4_i32 = arith.constant 4 : i32
    %21 = arith.addi %0, %c4_i32 : i32
    %22 = arith.index_cast %21 : i32 to index
    %23 = memref.load %arg1[%22] : memref<64xi32, #tpu.memory_space<smem>>
    %c0_i32_12 = arith.constant 0 : i32
    %24 = tpu.memref_slice %arg2[%23, %c0_i32_12] : memref<64x32xf32, #tpu.memory_space<any>> -> memref<1x32xf32, #tpu.memory_space<any>>
    %c4_i32_13 = arith.constant 4 : i32
    %c0_i32_14 = arith.constant 0 : i32
    %25 = tpu.memref_slice %arg11[%c4_i32_13, %c0_i32_14] : memref<64x32xf32, #tpu.memory_space<vmem>> -> memref<1x32xf32, #tpu.memory_space<vmem>>
    tpu.enqueue_dma source(%24 : memref<1x32xf32, #tpu.memory_space<any>>) target(%25 : memref<1x32xf32, #tpu.memory_space<vmem>>) target_semaphore(%arg12 : memref<!tpu.dma_semaphore, #tpu.memory_space<semaphore_mem>>)
    %c5_i32 = arith.constant 5 : i32
    %26 = arith.addi %0, %c5_i32 : i32
    %27 = arith.index_cast %26 : i32 to index
    %28 = memref.load %arg1[%27] : memref<64xi32, #tpu.memory_space<smem>>
    %c0_i32_15 = arith.constant 0 : i32
    %29 = tpu.memref_slice %arg2[%28, %c0_i32_15] : memref<64x32xf32, #tpu.memory_space<any>> -> memref<1x32xf32, #tpu.memory_space<any>>
    %c5_i32_16 = arith.constant 5 : i32
    %c0_i32_17 = arith.constant 0 : i32
    %30 = tpu.memref_slice %arg11[%c5_i32_16, %c0_i32_17] : memref<64x32xf32, #tpu.memory_space<vmem>> -> memref<1x32xf32, #tpu.memory_space<vmem>>
    tpu.enqueue_dma source(%29 : memref<1x32xf32, #tpu.memory_space<any>>) target(%30 : memref<1x32xf32, #tpu.memory_space<vmem>>) target_semaphore(%arg12 : memref<!tpu.dma_semaphore, #tpu.memory_space<semaphore_mem>>)
    %c6_i32 = arith.constant 6 : i32
    %31 = arith.addi %0, %c6_i32 : i32
    %32 = arith.index_cast %31 : i32 to index
    %33 = memref.load %arg1[%32] : memref<64xi32, #tpu.memory_space<smem>>
    %c0_i32_18 = arith.constant 0 : i32
    %34 = tpu.memref_slice %arg2[%33, %c0_i32_18] : memref<64x32xf32, #tpu.memory_space<any>> -> memref<1x32xf32, #tpu.memory_space<any>>
    %c6_i32_19 = arith.constant 6 : i32
    %c0_i32_20 = arith.constant 0 : i32
    %35 = tpu.memref_slice %arg11[%c6_i32_19, %c0_i32_20] : memref<64x32xf32, #tpu.memory_space<vmem>> -> memref<1x32xf32, #tpu.memory_space<vmem>>
    tpu.enqueue_dma source(%34 : memref<1x32xf32, #tpu.memory_space<any>>) target(%35 : memref<1x32xf32, #tpu.memory_space<vmem>>) target_semaphore(%arg12 : memref<!tpu.dma_semaphore, #tpu.memory_space<semaphore_mem>>)
    %c7_i32 = arith.constant 7 : i32
    %36 = arith.addi %0, %c7_i32 : i32
    %37 = arith.index_cast %36 : i32 to index
    %38 = memref.load %arg1[%37] : memref<64xi32, #tpu.memory_space<smem>>
    %c0_i32_21 = arith.constant 0 : i32
    %39 = tpu.memref_slice %arg2[%38, %c0_i32_21] : memref<64x32xf32, #tpu.memory_space<any>> -> memref<1x32xf32, #tpu.memory_space<any>>
    %c7_i32_22 = arith.constant 7 : i32
    %c0_i32_23 = arith.constant 0 : i32
    %40 = tpu.memref_slice %arg11[%c7_i32_22, %c0_i32_23] : memref<64x32xf32, #tpu.memory_space<vmem>> -> memref<1x32xf32, #tpu.memory_space<vmem>>
    tpu.enqueue_dma source(%39 : memref<1x32xf32, #tpu.memory_space<any>>) target(%40 : memref<1x32xf32, #tpu.memory_space<vmem>>) target_semaphore(%arg12 : memref<!tpu.dma_semaphore, #tpu.memory_space<semaphore_mem>>)
    %c0_i32_24 = arith.constant 0 : i32
    %c64_i32_25 = arith.constant 64 : i32
    %41 = arith.addi %c0_i32_24, %c64_i32_25 : i32
    %c1_i32_26 = arith.constant 1 : i32
    scf.for %arg13 = %c0_i32_24 to %41 step %c1_i32_26  : i32 {
      %c8_i32_56 = arith.constant 8 : i32
      %111 = arith.addi %arg13, %c8_i32_56 : i32
      %c64_i32_57 = arith.constant 64 : i32
      %112 = arith.cmpi slt, %111, %c64_i32_57 : i32
      %113 = arith.extui %112 : i1 to i32
      %c0_i32_58 = arith.constant 0 : i32
      %114 = arith.cmpi ne, %113, %c0_i32_58 : i32
      scf.if %114 {
        %c8_i32_61 = arith.constant 8 : i32
        %120 = arith.addi %arg13, %c8_i32_61 : i32
        %121 = arith.addi %0, %120 : i32
        %122 = arith.index_cast %121 : i32 to index
        %123 = memref.load %arg1[%122] : memref<64xi32, #tpu.memory_space<smem>>
        %c0_i32_62 = arith.constant 0 : i32
        %124 = tpu.memref_slice %arg2[%123, %c0_i32_62] : memref<64x32xf32, #tpu.memory_space<any>> -> memref<1x32xf32, #tpu.memory_space<any>>
        %c0_i32_63 = arith.constant 0 : i32
        %125 = tpu.memref_slice %arg11[%120, %c0_i32_63] : memref<64x32xf32, #tpu.memory_space<vmem>> -> memref<1x32xf32, #tpu.memory_space<vmem>>
        tpu.enqueue_dma source(%124 : memref<1x32xf32, #tpu.memory_space<any>>) target(%125 : memref<1x32xf32, #tpu.memory_space<vmem>>) target_semaphore(%arg12 : memref<!tpu.dma_semaphore, #tpu.memory_space<semaphore_mem>>)
      } else {
      }
      %115 = arith.addi %0, %arg13 : i32
      %116 = arith.index_cast %115 : i32 to index
      %117 = memref.load %arg1[%116] : memref<64xi32, #tpu.memory_space<smem>>
      %c0_i32_59 = arith.constant 0 : i32
      %118 = tpu.memref_slice %arg2[%117, %c0_i32_59] : memref<64x32xf32, #tpu.memory_space<any>> -> memref<1x32xf32, #tpu.memory_space<any>>
      %c0_i32_60 = arith.constant 0 : i32
      %119 = tpu.memref_slice %arg11[%arg13, %c0_i32_60] : memref<64x32xf32, #tpu.memory_space<vmem>> -> memref<1x32xf32, #tpu.memory_space<vmem>>
      tpu.wait_dma2 semaphore(%arg12 : memref<!tpu.dma_semaphore, #tpu.memory_space<semaphore_mem>>) src(%118 : memref<1x32xf32, #tpu.memory_space<any>>) dst(%119 : memref<1x32xf32, #tpu.memory_space<vmem>>)
    }
    %c64_i32_27 = arith.constant 64 : i32
    %c0 = arith.constant 0 : index
    %c0_28 = arith.constant 0 : index
    %42 = vector.load %arg3[%c0, %c0_28] : memref<8x1xi32, #tpu.memory_space<vmem>>, vector<8x1xi32>
    %43 = tpu.iota {dimensions = array<i32: 1>} : vector<8x8xi32>
    %44 = vector.broadcast %42 : vector<8x1xi32> to vector<8x8xi32>
    %45 = arith.cmpi slt, %43, %44 : vector<8x8xi32>
    %46 = arith.extui %45 : vector<8x8xi1> to vector<8x8xi32>
    %47 = arith.sitofp %46 : vector<8x8xi32> to vector<8x8xf32>
    %cst = arith.constant dense<0.000000e+00> : vector<8xf32>
    %48 = vector.multi_reduction <add>, %47, %cst [1] : vector<8x8xf32> to vector<8xf32>
    %49 = vector.shape_cast %48 : vector<8xf32> to vector<8x1xf32>
    %cst_29 = arith.constant 1.000000e+00 : f32
    %50 = vector.broadcast %cst_29 : f32 to vector<8x1xf32>
    %51 = arith.maximumf %49, %50 : vector<8x1xf32>
    %52 = tpu.iota {dimensions = array<i32: 0>} : vector<8x64xi32>
    %53 = tpu.iota {dimensions = array<i32: 1>} : vector<8x64xi32>
    %c8_i32 = arith.constant 8 : i32
    %54 = vector.broadcast %c8_i32 : i32 to vector<8x64xi32>
    %55 = arith.muli %52, %54 : vector<8x64xi32>
    %56 = arith.subi %53, %55 : vector<8x64xi32>
    %c0_i32_30 = arith.constant 0 : i32
    %57 = vector.broadcast %c0_i32_30 : i32 to vector<8x64xi32>
    %58 = arith.cmpi sge, %56, %57 : vector<8x64xi32>
    %c8_i32_31 = arith.constant 8 : i32
    %59 = vector.broadcast %c8_i32_31 : i32 to vector<8x64xi32>
    %60 = arith.cmpi slt, %56, %59 : vector<8x64xi32>
    %61 = vector.broadcast %42 : vector<8x1xi32> to vector<8x64xi32>
    %62 = arith.cmpi slt, %56, %61 : vector<8x64xi32>
    %63 = arith.andi %60, %62 : vector<8x64xi1>
    %64 = arith.andi %58, %63 : vector<8x64xi1>
    %65 = arith.extui %64 : vector<8x64xi1> to vector<8x64xi32>
    %66 = arith.sitofp %65 : vector<8x64xi32> to vector<8x64xf32>
    %c0_32 = arith.constant 0 : index
    %c0_33 = arith.constant 0 : index
    %67 = vector.load %arg11[%c0_32, %c0_33] : memref<64x32xf32, #tpu.memory_space<vmem>>, vector<64x32xf32>
    %cst_34 = arith.constant dense<0.000000e+00> : vector<8x32xf32>
    %68 = tpu.matmul %66, %67, %cst_34 {dimension_numbers = #tpu.dot_dimension_numbers<[1], [0], [0], [1], [0, 0, 1, 1], [], []>} : vector<8x64xf32>, vector<64x32xf32>, vector<8x32xf32> -> vector<8x32xf32>
    %c0_35 = arith.constant 0 : index
    %c0_36 = arith.constant 0 : index
    %69 = vector.load %arg4[%c0_35, %c0_36] : memref<8x8xi32, #tpu.memory_space<vmem>>, vector<8x8xi32>
    %c0_i32_37 = arith.constant 0 : i32
    %70 = vector.broadcast %c0_i32_37 : i32 to vector<8x8xi32>
    %71 = arith.cmpi eq, %69, %70 : vector<8x8xi32>
    %72 = arith.extui %71 : vector<8x8xi1> to vector<8x8xi32>
    %73 = arith.sitofp %72 : vector<8x8xi32> to vector<8x8xf32>
    %74 = arith.mulf %47, %73 : vector<8x8xf32>
    %cst_38 = arith.constant dense<0.000000e+00> : vector<8xf32>
    %75 = vector.multi_reduction <add>, %74, %cst_38 [1] : vector<8x8xf32> to vector<8xf32>
    %76 = vector.shape_cast %75 : vector<8xf32> to vector<8x1xf32>
    %c0_39 = arith.constant 0 : index
    %c0_40 = arith.constant 0 : index
    %77 = vector.load %arg5[%c0_39, %c0_40] : memref<2x32xf32, #tpu.memory_space<vmem>>, vector<1x32xf32>
    %78 = vector.broadcast %76 : vector<8x1xf32> to vector<8x32xf32>
    %79 = vector.broadcast %77 : vector<1x32xf32> to vector<8x32xf32>
    %80 = arith.mulf %78, %79 : vector<8x32xf32>
    %81 = arith.addf %68, %80 : vector<8x32xf32>
    %c1_i32_41 = arith.constant 1 : i32
    %82 = vector.broadcast %c1_i32_41 : i32 to vector<8x8xi32>
    %83 = arith.cmpi eq, %69, %82 : vector<8x8xi32>
    %84 = arith.extui %83 : vector<8x8xi1> to vector<8x8xi32>
    %85 = arith.sitofp %84 : vector<8x8xi32> to vector<8x8xf32>
    %86 = arith.mulf %47, %85 : vector<8x8xf32>
    %cst_42 = arith.constant dense<0.000000e+00> : vector<8xf32>
    %87 = vector.multi_reduction <add>, %86, %cst_42 [1] : vector<8x8xf32> to vector<8xf32>
    %88 = vector.shape_cast %87 : vector<8xf32> to vector<8x1xf32>
    %c1 = arith.constant 1 : index
    %c0_43 = arith.constant 0 : index
    %89 = vector.load %arg5[%c1, %c0_43] : memref<2x32xf32, #tpu.memory_space<vmem>>, vector<1x32xf32>
    %90 = vector.broadcast %88 : vector<8x1xf32> to vector<8x32xf32>
    %91 = vector.broadcast %89 : vector<1x32xf32> to vector<8x32xf32>
    %92 = arith.mulf %90, %91 : vector<8x32xf32>
    %93 = arith.addf %81, %92 : vector<8x32xf32>
    %94 = tpu.reciprocal %51 : vector<8x1xf32> -> vector<8x1xf32>
    %95 = vector.broadcast %94 : vector<8x1xf32> to vector<8x32xf32>
    %96 = arith.mulf %93, %95 : vector<8x32xf32>
    %97 = arith.truncf %96 : vector<8x32xf32> to vector<8x32xbf16>
    %c0_44 = arith.constant 0 : index
    %c0_45 = arith.constant 0 : index
    %98 = vector.load %arg6[%c0_44, %c0_45] : memref<32x32xbf16, #tpu.memory_space<vmem>>, vector<32x32xbf16>
    %cst_46 = arith.constant dense<0.000000e+00> : vector<8x32xf32>
    %99 = tpu.matmul %97, %98, %cst_46 {dimension_numbers = #tpu.dot_dimension_numbers<[1], [0], [0], [1], [0, 0, 1, 1], [], []>} : vector<8x32xbf16>, vector<32x32xbf16>, vector<8x32xf32> -> vector<8x32xf32>
    %c0_47 = arith.constant 0 : index
    %c0_48 = arith.constant 0 : index
    %100 = vector.load %arg7[%c0_47, %c0_48] : memref<1x32xf32, #tpu.memory_space<vmem>>, vector<1x32xf32>
    %101 = vector.broadcast %100 : vector<1x32xf32> to vector<8x32xf32>
    %102 = arith.addf %99, %101 : vector<8x32xf32>
    %103 = math.tanh %102 : vector<8x32xf32>
    %104 = arith.truncf %103 : vector<8x32xf32> to vector<8x32xbf16>
    %c0_49 = arith.constant 0 : index
    %c0_50 = arith.constant 0 : index
    %105 = vector.load %arg8[%c0_49, %c0_50] : memref<32x128xbf16, #tpu.memory_space<vmem>>, vector<32x128xbf16>
    %cst_51 = arith.constant dense<0.000000e+00> : vector<8x128xf32>
    %106 = tpu.matmul %104, %105, %cst_51 {dimension_numbers = #tpu.dot_dimension_numbers<[1], [0], [0], [1], [0, 0, 1, 1], [], []>} : vector<8x32xbf16>, vector<32x128xbf16>, vector<8x128xf32> -> vector<8x128xf32>
    %c0_52 = arith.constant 0 : index
    %c0_53 = arith.constant 0 : index
    %107 = vector.load %arg9[%c0_52, %c0_53] : memref<1x128xf32, #tpu.memory_space<vmem>>, vector<1x128xf32>
    %108 = vector.broadcast %107 : vector<1x128xf32> to vector<8x128xf32>
    %109 = arith.addf %106, %108 : vector<8x128xf32>
    %c0_54 = arith.constant 0 : index
    %c0_55 = arith.constant 0 : index
    %110 = vector.load %arg10[%c0_54, %c0_55] : memref<8x128xf32, #tpu.memory_space<vmem>>, vector<8x128xf32>
    tpu.vector_store %arg10[%c0_54, %c0_55], %109 {strides = array<i32>} : memref<8x128xf32, #tpu.memory_space<vmem>>, vector<8x128xf32>,
    return
  }
  func.func @transform_1(%arg0: i32, %arg1: memref<64xi32, #tpu.memory_space<smem>>) -> (i32, i32) {
    %c0_i32 = arith.constant 0 : i32
    %c0_i32_0 = arith.constant 0 : i32
    return %arg0, %c0_i32 : i32, i32
  }
  func.func @transform_2(%arg0: i32, %arg1: memref<64xi32, #tpu.memory_space<smem>>) -> (i32, i32) {
    %c0_i32 = arith.constant 0 : i32
    %c0_i32_0 = arith.constant 0 : i32
    return %arg0, %c0_i32 : i32, i32
  }
  func.func @transform_3(%arg0: i32, %arg1: memref<64xi32, #tpu.memory_space<smem>>) -> (i32, i32) {
    %c0_i32 = arith.constant 0 : i32
    %c0_i32_0 = arith.constant 0 : i32
    %c0_i32_1 = arith.constant 0 : i32
    return %c0_i32, %c0_i32_0 : i32, i32
  }
  func.func @transform_4(%arg0: i32, %arg1: memref<64xi32, #tpu.memory_space<smem>>) -> (i32, i32) {
    %c0_i32 = arith.constant 0 : i32
    %c0_i32_0 = arith.constant 0 : i32
    %c0_i32_1 = arith.constant 0 : i32
    return %c0_i32, %c0_i32_0 : i32, i32
  }
  func.func @transform_5(%arg0: i32, %arg1: memref<64xi32, #tpu.memory_space<smem>>) -> (i32, i32) {
    %c0_i32 = arith.constant 0 : i32
    %c0_i32_0 = arith.constant 0 : i32
    %c0_i32_1 = arith.constant 0 : i32
    return %c0_i32, %c0_i32_0 : i32, i32
  }
  func.func @transform_6(%arg0: i32, %arg1: memref<64xi32, #tpu.memory_space<smem>>) -> (i32, i32) {
    %c0_i32 = arith.constant 0 : i32
    %c0_i32_0 = arith.constant 0 : i32
    %c0_i32_1 = arith.constant 0 : i32
    return %c0_i32, %c0_i32_0 : i32, i32
  }
  func.func @transform_7(%arg0: i32, %arg1: memref<64xi32, #tpu.memory_space<smem>>) -> (i32, i32) {
    %c0_i32 = arith.constant 0 : i32
    %c0_i32_0 = arith.constant 0 : i32
    %c0_i32_1 = arith.constant 0 : i32
    return %c0_i32, %c0_i32_0 : i32, i32
  }
  func.func @transform_8(%arg0: i32, %arg1: memref<64xi32, #tpu.memory_space<smem>>) -> (i32, i32) {
    %c0_i32 = arith.constant 0 : i32
    %c0_i32_0 = arith.constant 0 : i32
    return %arg0, %c0_i32 : i32, i32
  }
}

</mosaic_0001>

<llo_original>
// kernel: tpu_custom_call.1
$region0: #{tpu_custom_call.1}
  #allocation0 [shape = 'u32[]', space=smem, size = 0x4, offset = 0x4, fixed_abs, tag = 'smem constant byte address 0x4 - core index']
  #allocation1 [shape = 'u32[72,128]{1,0:T(1,128)}', space=vmem, size = 0x9000, scoped, tag = 'internal scratch']
  #allocation2 [shape = 'f32[64,32]{1,0:T(8,128)}', space=vmem, size = 0x8000, scoped, tag = 'scratch operand']
  #allocation3 [shape = 's32[1]{0}', space=sflag, size = 0x4, scoped, tag = 'scratch operand']
  #allocation4 [shape = 's32[1]{0}', space=sflag, size = 0x4, scoped, tag = 'scoped memory for tpu_custom_call.1']
  #allocation5 [shape = 'u8[512]{0}', space=smem, size = 0x200, scoped, tag = 'prefetched SMEM operand 0']
  #allocation8 [shape = 's32[]', space=sflag, size = 0x4, offset = 0, fixed_abs, tag = 'sflag constant byte address 0x0 - dummy sync flag']
  #allocation9 [shape = 's32[]', space=sflag, size = 0x4, offset = 0, fixed_abs, tag = 'sflag constant byte address 0x0 - dummy sync flag']
  #allocation10 [shape = 's32[]', space=sflag, size = 0x4, offset = 0, fixed_abs, tag = 'sflag constant byte address 0x0 - dummy sync flag']
  #allocation11 [shape = 's32[]', space=sflag, size = 0x4, offset = 0, fixed_abs, tag = 'sflag constant byte address 0x0 - dummy sync flag']
  #allocation12 [shape = 's32[]', space=sflag, size = 0x4, offset = 0, fixed_abs, tag = 'sflag constant byte address 0x0 - dummy sync flag']
  #allocation13 [shape = 's32[]', space=sflag, size = 0x4, offset = 0, fixed_abs, tag = 'sflag constant byte address 0x0 - dummy sync flag']
  #allocation14 [shape = 's32[]', space=sflag, size = 0x4, offset = 0, fixed_abs, tag = 'sflag constant byte address 0x0 - dummy sync flag']
  #allocation15 [shape = 's32[]', space=sflag, size = 0x4, offset = 0, fixed_abs, tag = 'sflag constant byte address 0x0 - dummy sync flag']
  #allocation16 [shape = 's32[]', space=sflag, size = 0x4, offset = 0, fixed_abs, tag = 'sflag constant byte address 0x0 - dummy sync flag']
  %s0 = inlined_call_operand.vmem [shape: s32[64], index: 0, kind: input, shape index: {}]
  %s1 = inlined_call_operand.vmem [shape: f32[64,32], index: 1, kind: input, shape index: {}]
  %s2 = inlined_call_operand.vmem [shape: s32[8,1], index: 2, kind: input, shape index: {}]
  %s3 = inlined_call_operand.vmem [shape: s32[8,8], index: 3, kind: input, shape index: {}]
  %s4 = inlined_call_operand.vmem [shape: f32[2,32], index: 4, kind: input, shape index: {}]
  %s5 = inlined_call_operand.vmem [shape: bf16[32,32], index: 5, kind: input, shape index: {}]
  %s6 = inlined_call_operand.vmem [shape: f32[1,32], index: 6, kind: input, shape index: {}]
  %s7 = inlined_call_operand.vmem [shape: bf16[32,128], index: 7, kind: input, shape index: {}]
  %s8 = inlined_call_operand.vmem [shape: f32[1,128], index: 8, kind: input, shape index: {}]
  %s9 = inlined_call_operand.hbm [shape: f32[8,128], index: 9, kind: output, shape index: {}]
  %s10 = sld [smem:[#allocation0]]
  $region319: #{tpu_custom_call.1} parent=0
    _
  %s12 = ssub.s32 1, %s10
  %s13 = scalar_select 0, %s12, %s10
  %s15 = sshll.u32 %s0, 4
  %s16 = int_to_ptr.vmem [resolvable:$true] %s15
  %18 = dma.vmem_to_smem %s16, 16, [#allocation5], [#allocation4]
  %20 = dma.done [#allocation4], 16
  %21 = sfence
  $region1: #{tpu_custom_call.1} parent=0
    #allocation6 [shape = 'u8[4096]{0}', space=vmem, size = 0x1000, scoped, tag = 'output window, operand 0, single buffered']
    #allocation7 [shape = 's32[1]{0}', space=sflag, size = 0x4, scoped, tag = 'scoped memory for tpu_custom_call.1']
    %22 = vsyncpa [#allocation7], 0
    // Predicated region
    $region2: #{tpu_custom_call.1} parent=1 // pred_check
      _
    $region3: #{tpu_custom_call.1} parent=1 // pred_check_branch
      %24 = sbr.rel (0) target = $region5
    $region4: #{tpu_custom_call.1} parent=1 // pred_region
      _
    $region5: #{tpu_custom_call.1} parent=1 // pred_fallthru
      _
    // Predicated region
    $region6: #{tpu_custom_call.1} parent=1 // pred_check
      _
    $region7: #{tpu_custom_call.1} parent=1 // pred_check_branch
      %26 = sbr.rel (0) target = $region9
    $region8: #{tpu_custom_call.1} parent=1 // pred_region
      _
    $region9: #{tpu_custom_call.1} parent=1 // pred_fallthru
      _
    // Predicated region
    $region10: #{tpu_custom_call.1} parent=1 // pred_check
      _
    $region11: #{tpu_custom_call.1} parent=1 // pred_check_branch
      %28 = sbr.rel (0) target = $region13
    $region12: #{tpu_custom_call.1} parent=1 // pred_region
      _
    $region13: #{tpu_custom_call.1} parent=1 // pred_fallthru
      _
    // Predicated region
    $region14: #{tpu_custom_call.1} parent=1 // pred_check
      _
    $region15: #{tpu_custom_call.1} parent=1 // pred_check_branch
      %30 = sbr.rel (0) target = $region17
    $region16: #{tpu_custom_call.1} parent=1 // pred_region
      _
    $region17: #{tpu_custom_call.1} parent=1 // pred_fallthru
      _
    // Predicated region
    $region18: #{tpu_custom_call.1} parent=1 // pred_check
      _
    $region19: #{tpu_custom_call.1} parent=1 // pred_check_branch
      %32 = sbr.rel (0) target = $region21
    $region20: #{tpu_custom_call.1} parent=1 // pred_region
      _
    $region21: #{tpu_custom_call.1} parent=1 // pred_fallthru
      _
    // Predicated region
    $region22: #{tpu_custom_call.1} parent=1 // pred_check
      _
    $region23: #{tpu_custom_call.1} parent=1 // pred_check_branch
      %34 = sbr.rel (0) target = $region25
    $region24: #{tpu_custom_call.1} parent=1 // pred_region
      _
    $region25: #{tpu_custom_call.1} parent=1 // pred_fallthru
      _
    // Predicated region
    $region26: #{tpu_custom_call.1} parent=1 // pred_check
      _
    $region27: #{tpu_custom_call.1} parent=1 // pred_check_branch
      %36 = sbr.rel (0) target = $region29
    $region28: #{tpu_custom_call.1} parent=1 // pred_region
      _
    $region29: #{tpu_custom_call.1} parent=1 // pred_fallthru
      _
    %s38 = smul.u32 0, 64
    %s39 = sld [smem:[#allocation5 + %s38]]
    %s40 = scalar_lea.vmem %s1, %s39
    // Predicated region
    $region30: #{tpu_custom_call.1} parent=1 // pred_check
      _
    $region31: #{tpu_custom_call.1} parent=1 // pred_check_branch
      %42 = sbr.rel target = $region33
    $region32: #{tpu_custom_call.1} parent=1 // pred_region
      // Predicated region
      $region45: #{tpu_custom_call.1} parent=32 // pred_check
        _
      $region46: #{tpu_custom_call.1} parent=32 // pred_check_branch
        %58 = sbr.rel (0) target = $region48
      $region47: #{tpu_custom_call.1} parent=32 // pred_region
        %s60 = ssub.s32 2, 1
        loop: start=0, step=1, limit=1
        $region49: #{tpu_custom_call.1} parent=47 // loop_pre_header
          _
        $region50: #{tpu_custom_call.1} parent=47 // loop_header
          %s62 = sphi 0, %s66
          %p63 = scmp.ge.s32.totalorder %s62, 1
          %s67 = sphi %s40, %s40
          %s68 = sphi [#allocation2], [#allocation2]
        $region51: #{tpu_custom_call.1} parent=47 // loop_header_branch
          %65 = sbr.rel (%p63) target = $region55
        $region52: #{tpu_custom_call.1} parent=47 // loop_body
          %v69 = vld [vmem:[%s67] sm:%s60]
          %70 = vst [vmem:[%s68] sm:%s60] %v69
        $region53: #{tpu_custom_call.1} parent=47 // loop_footer
          %s66 = sadd.s32 1, %s62
        $region54: #{tpu_custom_call.1} parent=47 // loop_footer_branch
          %61 = sbr.rel target = $region50
        $region55: #{tpu_custom_call.1} parent=47 // loop_exit
          _
      $region48: #{tpu_custom_call.1} parent=32 // pred_fallthru
        _
    $region33: #{tpu_custom_call.1} parent=1 // pred_fallthru
      _
    // Predicated region
    $region34: #{tpu_custom_call.1} parent=1 // pred_check
      _
    $region35: #{tpu_custom_call.1} parent=1 // pred_check_branch
      %44 = sbr.rel (0) target = $region37
    $region36: #{tpu_custom_call.1} parent=1 // pred_region
      %s46 = ssub.s32 2, 1
      loop: start=0, step=1, limit=1
      $region38: #{tpu_custom_call.1} parent=36 // loop_pre_header
        _
      $region39: #{tpu_custom_call.1} parent=36 // loop_header
        %s48 = sphi 0, %s52
        %p49 = scmp.ge.s32.totalorder %s48, 1
        %s53 = sphi %s40, %s40
        %s54 = sphi [#allocation2], [#allocation2]
      $region40: #{tpu_custom_call.1} parent=36 // loop_header_branch
        %51 = sbr.rel (%p49) target = $region44
      $region41: #{tpu_custom_call.1} parent=36 // loop_body
        %v55 = vld [vmem:[%s53] sm:%s46]
        %56 = vst [vmem:[%s54] sm:%s46] %v55
      $region42: #{tpu_custom_call.1} parent=36 // loop_footer
        %s52 = sadd.s32 1, %s48
      $region43: #{tpu_custom_call.1} parent=36 // loop_footer_branch
        %47 = sbr.rel target = $region39
      $region44: #{tpu_custom_call.1} parent=36 // loop_exit
        _
    $region37: #{tpu_custom_call.1} parent=1 // pred_fallthru
      _
    // Predicated region
    $region56: #{tpu_custom_call.1} parent=1 // pred_check
      _
    $region57: #{tpu_custom_call.1} parent=1 // pred_check_branch
      %73 = sbr.rel (0) target = $region59
    $region58: #{tpu_custom_call.1} parent=1 // pred_region
      %74 = vsyncadd [#allocation3], 16
    $region59: #{tpu_custom_call.1} parent=1 // pred_fallthru
      _
    %s75 = sadd.s32 %s38, 1
    %s76 = sld [smem:[#allocation5 + %s75]]
    %s77 = scalar_lea.vmem %s1, %s76
    %s78 = scalar_lea.vmem [#allocation2], 1
    // Predicated region
    $region60: #{tpu_custom_call.1} parent=1 // pred_check
      _
    $region61: #{tpu_custom_call.1} parent=1 // pred_check_branch
      %80 = sbr.rel target = $region63
    $region62: #{tpu_custom_call.1} parent=1 // pred_region
      // Predicated region
      $region75: #{tpu_custom_call.1} parent=62 // pred_check
        _
      $region76: #{tpu_custom_call.1} parent=62 // pred_check_branch
        %96 = sbr.rel (0) target = $region78
      $region77: #{tpu_custom_call.1} parent=62 // pred_region
        %s98 = ssub.s32 2, 1
        loop: start=0, step=1, limit=1
        $region79: #{tpu_custom_call.1} parent=77 // loop_pre_header
          _
        $region80: #{tpu_custom_call.1} parent=77 // loop_header
          %s100 = sphi 0, %s104
          %p101 = scmp.ge.s32.totalorder %s100, 1
          %s105 = sphi %s77, %s77
          %s106 = sphi %s78, %s78
        $region81: #{tpu_custom_call.1} parent=77 // loop_header_branch
          %103 = sbr.rel (%p101) target = $region85
        $region82: #{tpu_custom_call.1} parent=77 // loop_body
          %v107 = vld [vmem:[%s105] sm:%s98]
          %108 = vst [vmem:[%s106] sm:%s98] %v107
        $region83: #{tpu_custom_call.1} parent=77 // loop_footer
          %s104 = sadd.s32 1, %s100
        $region84: #{tpu_custom_call.1} parent=77 // loop_footer_branch
          %99 = sbr.rel target = $region80
        $region85: #{tpu_custom_call.1} parent=77 // loop_exit
          _
      $region78: #{tpu_custom_call.1} parent=62 // pred_fallthru
        _
    $region63: #{tpu_custom_call.1} parent=1 // pred_fallthru
      _
    // Predicated region
    $region64: #{tpu_custom_call.1} parent=1 // pred_check
      _
    $region65: #{tpu_custom_call.1} parent=1 // pred_check_branch
      %82 = sbr.rel (0) target = $region67
    $region66: #{tpu_custom_call.1} parent=1 // pred_region
      %s84 = ssub.s32 2, 1
      loop: start=0, step=1, limit=1
      $region68: #{tpu_custom_call.1} parent=66 // loop_pre_header
        _
      $region69: #{tpu_custom_call.1} parent=66 // loop_header
        %s86 = sphi 0, %s90
        %p87 = scmp.ge.s32.totalorder %s86, 1
        %s91 = sphi %s77, %s77
        %s92 = sphi %s78, %s78
      $region70: #{tpu_custom_call.1} parent=66 // loop_header_branch
        %89 = sbr.rel (%p87) target = $region74
      $region71: #{tpu_custom_call.1} parent=66 // loop_body
        %v93 = vld [vmem:[%s91] sm:%s84]
        %94 = vst [vmem:[%s92] sm:%s84] %v93
      $region72: #{tpu_custom_call.1} parent=66 // loop_footer
        %s90 = sadd.s32 1, %s86
      $region73: #{tpu_custom_call.1} parent=66 // loop_footer_branch
        %85 = sbr.rel target = $region69
      $region74: #{tpu_custom_call.1} parent=66 // loop_exit
        _
    $region67: #{tpu_custom_call.1} parent=1 // pred_fallthru
      _
    // Predicated region
    $region86: #{tpu_custom_call.1} parent=1 // pred_check
      _
    $region87: #{tpu_custom_call.1} parent=1 // pred_check_branch
      %111 = sbr.rel (0) target = $region89
    $region88: #{tpu_custom_call.1} parent=1 // pred_region
      %112 = vsyncadd [#allocation3], 16
    $region89: #{tpu_custom_call.1} parent=1 // pred_fallthru
      _
    %s113 = sadd.s32 %s38, 2
    %s114 = sld [smem:[#allocation5 + %s113]]
    %s115 = scalar_lea.vmem %s1, %s114
    %s116 = scalar_lea.vmem [#allocation2], 2
    // Predicated region
    $region90: #{tpu_custom_call.1} parent=1 // pred_check
      _
    $region91: #{tpu_custom_call.1} parent=1 // pred_check_branch
      %118 = sbr.rel target = $region93
    $region92: #{tpu_custom_call.1} parent=1 // pred_region
      // Predicated region
      $region105: #{tpu_custom_call.1} parent=92 // pred_check
        _
      $region106: #{tpu_custom_call.1} parent=92 // pred_check_branch
        %134 = sbr.rel (0) target = $region108
      $region107: #{tpu_custom_call.1} parent=92 // pred_region
        %s136 = ssub.s32 2, 1
        loop: start=0, step=1, limit=1
        $region109: #{tpu_custom_call.1} parent=107 // loop_pre_header
          _
        $region110: #{tpu_custom_call.1} parent=107 // loop_header
          %s138 = sphi 0, %s142
          %p139 = scmp.ge.s32.totalorder %s138, 1
          %s143 = sphi %s115, %s115
          %s144 = sphi %s116, %s116
        $region111: #{tpu_custom_call.1} parent=107 // loop_header_branch
          %141 = sbr.rel (%p139) target = $region115
        $region112: #{tpu_custom_call.1} parent=107 // loop_body
          %v145 = vld [vmem:[%s143] sm:%s136]
          %146 = vst [vmem:[%s144] sm:%s136] %v145
        $region113: #{tpu_custom_call.1} parent=107 // loop_footer
          %s142 = sadd.s32 1, %s138
        $region114: #{tpu_custom_call.1} parent=107 // loop_footer_branch
          %137 = sbr.rel target = $region110
        $region115: #{tpu_custom_call.1} parent=107 // loop_exit
          _
      $region108: #{tpu_custom_call.1} parent=92 // pred_fallthru
        _
    $region93: #{tpu_custom_call.1} parent=1 // pred_fallthru
      _
    // Predicated region
    $region94: #{tpu_custom_call.1} parent=1 // pred_check
      _
    $region95: #{tpu_custom_call.1} parent=1 // pred_check_branch
      %120 = sbr.rel (0) target = $region97
    $region96: #{tpu_custom_call.1} parent=1 // pred_region
      %s122 = ssub.s32 2, 1
      loop: start=0, step=1, limit=1
      $region98: #{tpu_custom_call.1} parent=96 // loop_pre_header
        _
      $region99: #{tpu_custom_call.1} parent=96 // loop_header
        %s124 = sphi 0, %s128
        %p125 = scmp.ge.s32.totalorder %s124, 1
        %s129 = sphi %s115, %s115
        %s130 = sphi %s116, %s116
      $region100: #{tpu_custom_call.1} parent=96 // loop_header_branch
        %127 = sbr.rel (%p125) target = $region104
      $region101: #{tpu_custom_call.1} parent=96 // loop_body
        %v131 = vld [vmem:[%s129] sm:%s122]
        %132 = vst [vmem:[%s130] sm:%s122] %v131
      $region102: #{tpu_custom_call.1} parent=96 // loop_footer
        %s128 = sadd.s32 1, %s124
      $region103: #{tpu_custom_call.1} parent=96 // loop_footer_branch
        %123 = sbr.rel target = $region99
      $region104: #{tpu_custom_call.1} parent=96 // loop_exit
        _
    $region97: #{tpu_custom_call.1} parent=1 // pred_fallthru
      _
    // Predicated region
    $region116: #{tpu_custom_call.1} parent=1 // pred_check
      _
    $region117: #{tpu_custom_call.1} parent=1 // pred_check_branch
      %149 = sbr.rel (0) target = $region119
    $region118: #{tpu_custom_call.1} parent=1 // pred_region
      %150 = vsyncadd [#allocation3], 16
    $region119: #{tpu_custom_call.1} parent=1 // pred_fallthru
      _
    %s151 = sadd.s32 %s38, 3
    %s152 = sld [smem:[#allocation5 + %s151]]
    %s153 = scalar_lea.vmem %s1, %s152
    %s154 = scalar_lea.vmem [#allocation2], 3
    // Predicated region
    $region120: #{tpu_custom_call.1} parent=1 // pred_check
      _
    $region121: #{tpu_custom_call.1} parent=1 // pred_check_branch
      %156 = sbr.rel target = $region123
    $region122: #{tpu_custom_call.1} parent=1 // pred_region
      // Predicated region
      $region135: #{tpu_custom_call.1} parent=122 // pred_check
        _
      $region136: #{tpu_custom_call.1} parent=122 // pred_check_branch
        %172 = sbr.rel (0) target = $region138
      $region137: #{tpu_custom_call.1} parent=122 // pred_region
        %s174 = ssub.s32 2, 1
        loop: start=0, step=1, limit=1
        $region139: #{tpu_custom_call.1} parent=137 // loop_pre_header
          _
        $region140: #{tpu_custom_call.1} parent=137 // loop_header
          %s176 = sphi 0, %s180
          %p177 = scmp.ge.s32.totalorder %s176, 1
          %s181 = sphi %s153, %s153
          %s182 = sphi %s154, %s154
        $region141: #{tpu_custom_call.1} parent=137 // loop_header_branch
          %179 = sbr.rel (%p177) target = $region145
        $region142: #{tpu_custom_call.1} parent=137 // loop_body
          %v183 = vld [vmem:[%s181] sm:%s174]
          %184 = vst [vmem:[%s182] sm:%s174] %v183
        $region143: #{tpu_custom_call.1} parent=137 // loop_footer
          %s180 = sadd.s32 1, %s176
        $region144: #{tpu_custom_call.1} parent=137 // loop_footer_branch
          %175 = sbr.rel target = $region140
        $region145: #{tpu_custom_call.1} parent=137 // loop_exit
          _
      $region138: #{tpu_custom_call.1} parent=122 // pred_fallthru
        _
    $region123: #{tpu_custom_call.1} parent=1 // pred_fallthru
      _
    // Predicated region
    $region124: #{tpu_custom_call.1} parent=1 // pred_check
      _
    $region125: #{tpu_custom_call.1} parent=1 // pred_check_branch
      %158 = sbr.rel (0) target = $region127
    $region126: #{tpu_custom_call.1} parent=1 // pred_region
      %s160 = ssub.s32 2, 1
      loop: start=0, step=1, limit=1
      $region128: #{tpu_custom_call.1} parent=126 // loop_pre_header
        _
      $region129: #{tpu_custom_call.1} parent=126 // loop_header
        %s162 = sphi 0, %s166
        %p163 = scmp.ge.s32.totalorder %s162, 1
        %s167 = sphi %s153, %s153
        %s168 = sphi %s154, %s154
      $region130: #{tpu_custom_call.1} parent=126 // loop_header_branch
        %165 = sbr.rel (%p163) target = $region134
      $region131: #{tpu_custom_call.1} parent=126 // loop_body
        %v169 = vld [vmem:[%s167] sm:%s160]
        %170 = vst [vmem:[%s168] sm:%s160] %v169
      $region132: #{tpu_custom_call.1} parent=126 // loop_footer
        %s166 = sadd.s32 1, %s162
      $region133: #{tpu_custom_call.1} parent=126 // loop_footer_branch
        %161 = sbr.rel target = $region129
      $region134: #{tpu_custom_call.1} parent=126 // loop_exit
        _
    $region127: #{tpu_custom_call.1} parent=1 // pred_fallthru
      _
    // Predicated region
    $region146: #{tpu_custom_call.1} parent=1 // pred_check
      _
    $region147: #{tpu_custom_call.1} parent=1 // pred_check_branch
      %187 = sbr.rel (0) target = $region149
    $region148: #{tpu_custom_call.1} parent=1 // pred_region
      %188 = vsyncadd [#allocation3], 16
    $region149: #{tpu_custom_call.1} parent=1 // pred_fallthru
      _
    %s189 = sadd.s32 %s38, 4
    %s190 = sld [smem:[#allocation5 + %s189]]
    %s191 = scalar_lea.vmem %s1, %s190
    %s192 = scalar_lea.vmem [#allocation2], 4
    // Predicated region
    $region150: #{tpu_custom_call.1} parent=1 // pred_check
      _
    $region151: #{tpu_custom_call.1} parent=1 // pred_check_branch
      %194 = sbr.rel target = $region153
    $region152: #{tpu_custom_call.1} parent=1 // pred_region
      // Predicated region
      $region165: #{tpu_custom_call.1} parent=152 // pred_check
        _
      $region166: #{tpu_custom_call.1} parent=152 // pred_check_branch
        %210 = sbr.rel (0) target = $region168
      $region167: #{tpu_custom_call.1} parent=152 // pred_region
        %s212 = ssub.s32 2, 1
        loop: start=0, step=1, limit=1
        $region169: #{tpu_custom_call.1} parent=167 // loop_pre_header
          _
        $region170: #{tpu_custom_call.1} parent=167 // loop_header
          %s214 = sphi 0, %s218
          %p215 = scmp.ge.s32.totalorder %s214, 1
          %s219 = sphi %s191, %s191
          %s220 = sphi %s192, %s192
        $region171: #{tpu_custom_call.1} parent=167 // loop_header_branch
          %217 = sbr.rel (%p215) target = $region175
        $region172: #{tpu_custom_call.1} parent=167 // loop_body
          %v221 = vld [vmem:[%s219] sm:%s212]
          %222 = vst [vmem:[%s220] sm:%s212] %v221
        $region173: #{tpu_custom_call.1} parent=167 // loop_footer
          %s218 = sadd.s32 1, %s214
        $region174: #{tpu_custom_call.1} parent=167 // loop_footer_branch
          %213 = sbr.rel target = $region170
        $region175: #{tpu_custom_call.1} parent=167 // loop_exit
          _
      $region168: #{tpu_custom_call.1} parent=152 // pred_fallthru
        _
    $region153: #{tpu_custom_call.1} parent=1 // pred_fallthru
      _
    // Predicated region
    $region154: #{tpu_custom_call.1} parent=1 // pred_check
      _
    $region155: #{tpu_custom_call.1} parent=1 // pred_check_branch
      %196 = sbr.rel (0) target = $region157
    $region156: #{tpu_custom_call.1} parent=1 // pred_region
      %s198 = ssub.s32 2, 1
      loop: start=0, step=1, limit=1
      $region158: #{tpu_custom_call.1} parent=156 // loop_pre_header
        _
      $region159: #{tpu_custom_call.1} parent=156 // loop_header
        %s200 = sphi 0, %s204
        %p201 = scmp.ge.s32.totalorder %s200, 1
        %s205 = sphi %s191, %s191
        %s206 = sphi %s192, %s192
      $region160: #{tpu_custom_call.1} parent=156 // loop_header_branch
        %203 = sbr.rel (%p201) target = $region164
      $region161: #{tpu_custom_call.1} parent=156 // loop_body
        %v207 = vld [vmem:[%s205] sm:%s198]
        %208 = vst [vmem:[%s206] sm:%s198] %v207
      $region162: #{tpu_custom_call.1} parent=156 // loop_footer
        %s204 = sadd.s32 1, %s200
      $region163: #{tpu_custom_call.1} parent=156 // loop_footer_branch
        %199 = sbr.rel target = $region159
      $region164: #{tpu_custom_call.1} parent=156 // loop_exit
        _
    $region157: #{tpu_custom_call.1} parent=1 // pred_fallthru
      _
    // Predicated region
    $region176: #{tpu_custom_call.1} parent=1 // pred_check
      _
    $region177: #{tpu_custom_call.1} parent=1 // pred_check_branch
      %225 = sbr.rel (0) target = $region179
    $region178: #{tpu_custom_call.1} parent=1 // pred_region
      %226 = vsyncadd [#allocation3], 16
    $region179: #{tpu_custom_call.1} parent=1 // pred_fallthru
      _
    %s227 = sadd.s32 %s38, 5
    %s228 = sld [smem:[#allocation5 + %s227]]
    %s229 = scalar_lea.vmem %s1, %s228
    %s230 = scalar_lea.vmem [#allocation2], 5
    // Predicated region
    $region180: #{tpu_custom_call.1} parent=1 // pred_check
      _
    $region181: #{tpu_custom_call.1} parent=1 // pred_check_branch
      %232 = sbr.rel target = $region183
    $region182: #{tpu_custom_call.1} parent=1 // pred_region
      // Predicated region
      $region195: #{tpu_custom_call.1} parent=182 // pred_check
        _
      $region196: #{tpu_custom_call.1} parent=182 // pred_check_branch
        %248 = sbr.rel (0) target = $region198
      $region197: #{tpu_custom_call.1} parent=182 // pred_region
        %s250 = ssub.s32 2, 1
        loop: start=0, step=1, limit=1
        $region199: #{tpu_custom_call.1} parent=197 // loop_pre_header
          _
        $region200: #{tpu_custom_call.1} parent=197 // loop_header
          %s252 = sphi 0, %s256
          %p253 = scmp.ge.s32.totalorder %s252, 1
          %s257 = sphi %s229, %s229
          %s258 = sphi %s230, %s230
        $region201: #{tpu_custom_call.1} parent=197 // loop_header_branch
          %255 = sbr.rel (%p253) target = $region205
        $region202: #{tpu_custom_call.1} parent=197 // loop_body
          %v259 = vld [vmem:[%s257] sm:%s250]
          %260 = vst [vmem:[%s258] sm:%s250] %v259
        $region203: #{tpu_custom_call.1} parent=197 // loop_footer
          %s256 = sadd.s32 1, %s252
        $region204: #{tpu_custom_call.1} parent=197 // loop_footer_branch
          %251 = sbr.rel target = $region200
        $region205: #{tpu_custom_call.1} parent=197 // loop_exit
          _
      $region198: #{tpu_custom_call.1} parent=182 // pred_fallthru
        _
    $region183: #{tpu_custom_call.1} parent=1 // pred_fallthru
      _
    // Predicated region
    $region184: #{tpu_custom_call.1} parent=1 // pred_check
      _
    $region185: #{tpu_custom_call.1} parent=1 // pred_check_branch
      %234 = sbr.rel (0) target = $region187
    $region186: #{tpu_custom_call.1} parent=1 // pred_region
      %s236 = ssub.s32 2, 1
      loop: start=0, step=1, limit=1
      $region188: #{tpu_custom_call.1} parent=186 // loop_pre_header
        _
      $region189: #{tpu_custom_call.1} parent=186 // loop_header
        %s238 = sphi 0, %s242
        %p239 = scmp.ge.s32.totalorder %s238, 1
        %s243 = sphi %s229, %s229
        %s244 = sphi %s230, %s230
      $region190: #{tpu_custom_call.1} parent=186 // loop_header_branch
        %241 = sbr.rel (%p239) target = $region194
      $region191: #{tpu_custom_call.1} parent=186 // loop_body
        %v245 = vld [vmem:[%s243] sm:%s236]
        %246 = vst [vmem:[%s244] sm:%s236] %v245
      $region192: #{tpu_custom_call.1} parent=186 // loop_footer
        %s242 = sadd.s32 1, %s238
      $region193: #{tpu_custom_call.1} parent=186 // loop_footer_branch
        %237 = sbr.rel target = $region189
      $region194: #{tpu_custom_call.1} parent=186 // loop_exit
        _
    $region187: #{tpu_custom_call.1} parent=1 // pred_fallthru
      _
    // Predicated region
    $region206: #{tpu_custom_call.1} parent=1 // pred_check
      _
    $region207: #{tpu_custom_call.1} parent=1 // pred_check_branch
      %263 = sbr.rel (0) target = $region209
    $region208: #{tpu_custom_call.1} parent=1 // pred_region
      %264 = vsyncadd [#allocation3], 16
    $region209: #{tpu_custom_call.1} parent=1 // pred_fallthru
      _
    %s265 = sadd.s32 %s38, 6
    %s266 = sld [smem:[#allocation5 + %s265]]
    %s267 = scalar_lea.vmem %s1, %s266
    %s268 = scalar_lea.vmem [#allocation2], 6
    // Predicated region
    $region210: #{tpu_custom_call.1} parent=1 // pred_check
      _
    $region211: #{tpu_custom_call.1} parent=1 // pred_check_branch
      %270 = sbr.rel target = $region213
    $region212: #{tpu_custom_call.1} parent=1 // pred_region
      // Predicated region
      $region225: #{tpu_custom_call.1} parent=212 // pred_check
        _
      $region226: #{tpu_custom_call.1} parent=212 // pred_check_branch
        %286 = sbr.rel (0) target = $region228
      $region227: #{tpu_custom_call.1} parent=212 // pred_region
        %s288 = ssub.s32 2, 1
        loop: start=0, step=1, limit=1
        $region229: #{tpu_custom_call.1} parent=227 // loop_pre_header
          _
        $region230: #{tpu_custom_call.1} parent=227 // loop_header
          %s290 = sphi 0, %s294
          %p291 = scmp.ge.s32.totalorder %s290, 1
          %s295 = sphi %s267, %s267
          %s296 = sphi %s268, %s268
        $region231: #{tpu_custom_call.1} parent=227 // loop_header_branch
          %293 = sbr.rel (%p291) target = $region235
        $region232: #{tpu_custom_call.1} parent=227 // loop_body
          %v297 = vld [vmem:[%s295] sm:%s288]
          %298 = vst [vmem:[%s296] sm:%s288] %v297
        $region233: #{tpu_custom_call.1} parent=227 // loop_footer
          %s294 = sadd.s32 1, %s290
        $region234: #{tpu_custom_call.1} parent=227 // loop_footer_branch
          %289 = sbr.rel target = $region230
        $region235: #{tpu_custom_call.1} parent=227 // loop_exit
          _
      $region228: #{tpu_custom_call.1} parent=212 // pred_fallthru
        _
    $region213: #{tpu_custom_call.1} parent=1 // pred_fallthru
      _
    // Predicated region
    $region214: #{tpu_custom_call.1} parent=1 // pred_check
      _
    $region215: #{tpu_custom_call.1} parent=1 // pred_check_branch
      %272 = sbr.rel (0) target = $region217
    $region216: #{tpu_custom_call.1} parent=1 // pred_region
      %s274 = ssub.s32 2, 1
      loop: start=0, step=1, limit=1
      $region218: #{tpu_custom_call.1} parent=216 // loop_pre_header
        _
      $region219: #{tpu_custom_call.1} parent=216 // loop_header
        %s276 = sphi 0, %s280
        %p277 = scmp.ge.s32.totalorder %s276, 1
        %s281 = sphi %s267, %s267
        %s282 = sphi %s268, %s268
      $region220: #{tpu_custom_call.1} parent=216 // loop_header_branch
        %279 = sbr.rel (%p277) target = $region224
      $region221: #{tpu_custom_call.1} parent=216 // loop_body
        %v283 = vld [vmem:[%s281] sm:%s274]
        %284 = vst [vmem:[%s282] sm:%s274] %v283
      $region222: #{tpu_custom_call.1} parent=216 // loop_footer
        %s280 = sadd.s32 1, %s276
      $region223: #{tpu_custom_call.1} parent=216 // loop_footer_branch
        %275 = sbr.rel target = $region219
      $region224: #{tpu_custom_call.1} parent=216 // loop_exit
        _
    $region217: #{tpu_custom_call.1} parent=1 // pred_fallthru
      _
    // Predicated region
    $region236: #{tpu_custom_call.1} parent=1 // pred_check
      _
    $region237: #{tpu_custom_call.1} parent=1 // pred_check_branch
      %301 = sbr.rel (0) target = $region239
    $region238: #{tpu_custom_call.1} parent=1 // pred_region
      %302 = vsyncadd [#allocation3], 16
    $region239: #{tpu_custom_call.1} parent=1 // pred_fallthru
      _
    %s303 = sadd.s32 %s38, 7
    %s304 = sld [smem:[#allocation5 + %s303]]
    %s305 = scalar_lea.vmem %s1, %s304
    %s306 = scalar_lea.vmem [#allocation2], 7
    // Predicated region
    $region240: #{tpu_custom_call.1} parent=1 // pred_check
      _
    $region241: #{tpu_custom_call.1} parent=1 // pred_check_branch
      %308 = sbr.rel target = $region243
    $region242: #{tpu_custom_call.1} parent=1 // pred_region
      // Predicated region
      $region255: #{tpu_custom_call.1} parent=242 // pred_check
        _
      $region256: #{tpu_custom_call.1} parent=242 // pred_check_branch
        %324 = sbr.rel (0) target = $region258
      $region257: #{tpu_custom_call.1} parent=242 // pred_region
        %s326 = ssub.s32 2, 1
        loop: start=0, step=1, limit=1
        $region259: #{tpu_custom_call.1} parent=257 // loop_pre_header
          _
        $region260: #{tpu_custom_call.1} parent=257 // loop_header
          %s328 = sphi 0, %s332
          %p329 = scmp.ge.s32.totalorder %s328, 1
          %s333 = sphi %s305, %s305
          %s334 = sphi %s306, %s306
        $region261: #{tpu_custom_call.1} parent=257 // loop_header_branch
          %331 = sbr.rel (%p329) target = $region265
        $region262: #{tpu_custom_call.1} parent=257 // loop_body
          %v335 = vld [vmem:[%s333] sm:%s326]
          %336 = vst [vmem:[%s334] sm:%s326] %v335
        $region263: #{tpu_custom_call.1} parent=257 // loop_footer
          %s332 = sadd.s32 1, %s328
        $region264: #{tpu_custom_call.1} parent=257 // loop_footer_branch
          %327 = sbr.rel target = $region260
        $region265: #{tpu_custom_call.1} parent=257 // loop_exit
          _
      $region258: #{tpu_custom_call.1} parent=242 // pred_fallthru
        _
    $region243: #{tpu_custom_call.1} parent=1 // pred_fallthru
      _
    // Predicated region
    $region244: #{tpu_custom_call.1} parent=1 // pred_check
      _
    $region245: #{tpu_custom_call.1} parent=1 // pred_check_branch
      %310 = sbr.rel (0) target = $region247
    $region246: #{tpu_custom_call.1} parent=1 // pred_region
      %s312 = ssub.s32 2, 1
      loop: start=0, step=1, limit=1
      $region248: #{tpu_custom_call.1} parent=246 // loop_pre_header
        _
      $region249: #{tpu_custom_call.1} parent=246 // loop_header
        %s314 = sphi 0, %s318
        %p315 = scmp.ge.s32.totalorder %s314, 1
        %s319 = sphi %s305, %s305
        %s320 = sphi %s306, %s306
      $region250: #{tpu_custom_call.1} parent=246 // loop_header_branch
        %317 = sbr.rel (%p315) target = $region254
      $region251: #{tpu_custom_call.1} parent=246 // loop_body
        %v321 = vld [vmem:[%s319] sm:%s312]
        %322 = vst [vmem:[%s320] sm:%s312] %v321
      $region252: #{tpu_custom_call.1} parent=246 // loop_footer
        %s318 = sadd.s32 1, %s314
      $region253: #{tpu_custom_call.1} parent=246 // loop_footer_branch
        %313 = sbr.rel target = $region249
      $region254: #{tpu_custom_call.1} parent=246 // loop_exit
        _
    $region247: #{tpu_custom_call.1} parent=1 // pred_fallthru
      _
    // Predicated region
    $region266: #{tpu_custom_call.1} parent=1 // pred_check
      _
    $region267: #{tpu_custom_call.1} parent=1 // pred_check_branch
      %339 = sbr.rel (0) target = $region269
    $region268: #{tpu_custom_call.1} parent=1 // pred_region
      %340 = vsyncadd [#allocation3], 16
    $region269: #{tpu_custom_call.1} parent=1 // pred_fallthru
      _
    loop: start=0, step=1, limit=64
    $region270: #{tpu_custom_call.1} parent=1 // loop_pre_header
      _
    $region271: #{tpu_custom_call.1} parent=1 // loop_header
      %s342 = sphi 0, %s346
      %p343 = scmp.ge.s32.totalorder %s342, 64
    $region272: #{tpu_custom_call.1} parent=1 // loop_header_branch
      %345 = sbr.rel (%p343) target = $region276
    $region273: #{tpu_custom_call.1} parent=1 // loop_body
      %s347 = sadd.s32 %s342, 8
      %p348 = scmp.lt.s32.totalorder %s347, 64
      // Predicated region
      $region277: #{tpu_custom_call.1} parent=273 // pred_check
        %p349 = pneg %p348
      $region278: #{tpu_custom_call.1} parent=273 // pred_check_branch
        %351 = sbr.rel (%p349) target = $region280
      $region279: #{tpu_custom_call.1} parent=273 // pred_region
        %s352 = sadd.s32 %s38, %s347
        %s353 = sld [smem:[#allocation5 + %s352]]
        %s354 = scalar_lea.vmem %s1, %s353
        %s355 = scalar_lea.vmem [#allocation2], %s347
        // Predicated region
        $region281: #{tpu_custom_call.1} parent=279 // pred_check
          _
        $region282: #{tpu_custom_call.1} parent=279 // pred_check_branch
          %357 = sbr.rel target = $region284
        $region283: #{tpu_custom_call.1} parent=279 // pred_region
          // Predicated region
          $region296: #{tpu_custom_call.1} parent=283 // pred_check
            _
          $region297: #{tpu_custom_call.1} parent=283 // pred_check_branch
            %373 = sbr.rel (0) target = $region299
          $region298: #{tpu_custom_call.1} parent=283 // pred_region
            %s375 = ssub.s32 2, 1
            loop: start=0, step=1, limit=1
            $region300: #{tpu_custom_call.1} parent=298 // loop_pre_header
              _
            $region301: #{tpu_custom_call.1} parent=298 // loop_header
              %s377 = sphi 0, %s381
              %p378 = scmp.ge.s32.totalorder %s377, 1
              %s382 = sphi %s354, %s354
              %s383 = sphi %s355, %s355
            $region302: #{tpu_custom_call.1} parent=298 // loop_header_branch
              %380 = sbr.rel (%p378) target = $region306
            $region303: #{tpu_custom_call.1} parent=298 // loop_body
              %v384 = vld [vmem:[%s382] sm:%s375]
              %385 = vst [vmem:[%s383] sm:%s375] %v384
            $region304: #{tpu_custom_call.1} parent=298 // loop_footer
              %s381 = sadd.s32 1, %s377
            $region305: #{tpu_custom_call.1} parent=298 // loop_footer_branch
              %376 = sbr.rel target = $region301
            $region306: #{tpu_custom_call.1} parent=298 // loop_exit
              _
          $region299: #{tpu_custom_call.1} parent=283 // pred_fallthru
            _
        $region284: #{tpu_custom_call.1} parent=279 // pred_fallthru
          _
        // Predicated region
        $region285: #{tpu_custom_call.1} parent=279 // pred_check
          _
        $region286: #{tpu_custom_call.1} parent=279 // pred_check_branch
          %359 = sbr.rel (0) target = $region288
        $region287: #{tpu_custom_call.1} parent=279 // pred_region
          %s361 = ssub.s32 2, 1
          loop: start=0, step=1, limit=1
          $region289: #{tpu_custom_call.1} parent=287 // loop_pre_header
            _
          $region290: #{tpu_custom_call.1} parent=287 // loop_header
            %s363 = sphi 0, %s367
            %p364 = scmp.ge.s32.totalorder %s363, 1
            %s368 = sphi %s354, %s354
            %s369 = sphi %s355, %s355
          $region291: #{tpu_custom_call.1} parent=287 // loop_header_branch
            %366 = sbr.rel (%p364) target = $region295
          $region292: #{tpu_custom_call.1} parent=287 // loop_body
            %v370 = vld [vmem:[%s368] sm:%s361]
            %371 = vst [vmem:[%s369] sm:%s361] %v370
          $region293: #{tpu_custom_call.1} parent=287 // loop_footer
            %s367 = sadd.s32 1, %s363
          $region294: #{tpu_custom_call.1} parent=287 // loop_footer_branch
            %362 = sbr.rel target = $region290
          $region295: #{tpu_custom_call.1} parent=287 // loop_exit
            _
        $region288: #{tpu_custom_call.1} parent=279 // pred_fallthru
          _
        // Predicated region
        $region307: #{tpu_custom_call.1} parent=279 // pred_check
          _
        $region308: #{tpu_custom_call.1} parent=279 // pred_check_branch
          %388 = sbr.rel (0) target = $region310
        $region309: #{tpu_custom_call.1} parent=279 // pred_region
          %389 = vsyncadd [#allocation3], 16
        $region310: #{tpu_custom_call.1} parent=279 // pred_fallthru
          _
      $region280: #{tpu_custom_call.1} parent=273 // pred_fallthru
        _
      %s390 = sadd.s32 %s38, %s342
      %s391 = sld [smem:[#allocation5 + %s390]]
      %s392 = smul.u32 1, 1
      %s393 = sshll.u32 %s392, 4
      %394 = dma.done [#allocation3], %s393
    $region274: #{tpu_custom_call.1} parent=1 // loop_footer
      %s346 = sadd.s32 1, %s342
    $region275: #{tpu_custom_call.1} parent=1 // loop_footer_branch
      %341 = sbr.rel target = $region271
    $region276: #{tpu_custom_call.1} parent=1 // loop_exit
      _
    %v395 = vld [vmem:[%s2] sm:$0xff]
    %v396 = vlaneseq
    %v397 = vand.u32 %v396, 127
    %398 = vset.pattern.permute.xlu0 0
    %399 = vperm.xlu0 %398, %v395
    %v400 = vpop.permute.xlu0 %399
    %vm401 = vcmp.lt.s32.totalorder %v397, %v400
    %v402 = vsel %vm401, 1, 0
    %v403 = vcvt.s32.f32 %v402
    %vm404 = vcmask 64512
    %v405 = vsel %vm404, %v403, 0.0
    %406 = vadd.xlane.f32.xlu0 %v405
    %v407 = vpop.xlane.xlu0 %406
    %v408 = vmax.f32 %v407, 1.0
    %v409 = vlaneseq
    %v410 = vshrl.u32 %v409, 7
    %v411 = vmul.u32 %v410, 8
    %v412 = vsub.s32 %v397, %v411
    %vm413 = vcmp.ge.s32.totalorder %v412, 0
    %vm414 = vcmp.lt.s32.totalorder %v412, 8
    %vm415 = vcmp.lt.s32.totalorder %v412, %v400
    %vm416 = vmand %vm414, %vm415
    %vm417 = vmand %vm413, %vm416
    %v418 = vsel %vm417, 1, 0
    %v419 = vcvt.s32.f32 %v418
    %v420 = vld [vmem:[#allocation2] sm:$0xff]
    %v421 = vld [vmem:[#allocation2 + $0x8] sm:$0xff]
    %v422 = vld [vmem:[#allocation2 + $0x10] sm:$0xff]
    %v423 = vld [vmem:[#allocation2 + $0x18] sm:$0xff]
    %v424 = vld [vmem:[#allocation2 + $0x20] sm:$0xff]
    %v425 = vld [vmem:[#allocation2 + $0x28] sm:$0xff]
    %v426 = vld [vmem:[#allocation2 + $0x30] sm:$0xff]
    %v427 = vld [vmem:[#allocation2 + $0x38] sm:$0xff]
    %v428 = vld [vmem:[%s3] sm:$0xff]
    %vm429 = vcmp.eq.s32.totalorder %v428, 0
    %v430 = vsel %vm429, 1, 0
    %v431 = vcvt.s32.f32 %v430
    %v432 = vmul.f32 %v403, %v431
    %v433 = vsel %vm404, %v432, 0.0
    %434 = vadd.xlane.f32.xlu0 %v433
    %v435 = vpop.xlane.xlu0 %434
    %v436 = vld [vmem:[%s4] sm:$0x1]
    %v437 = vperm.slane %v436, 0
    %v438 = vmul.f32 %v435, %v437
    %vm439 = vcmask 523264
    %v441 = vsel %vm439, %v419, 0
    %443 = vmatpush.msra.mxu0 0.0
    %444 = vmatpush.msra.mxu0 0.0
    %445 = vmatpush.msra.mxu0 0.0
    %446 = vmatpush.msra.mxu0 0.0
    %447 = vmatpush.msra.mxu0 0.0
    %448 = vmatpush.msra.mxu0 0.0
    %449 = vmatpush.msra.mxu0 0.0
    %450 = vmatpush.msra.mxu0 0.0
    %451 = vmatpush.msra.mxu0 %v427
    %452 = vmatpush.msra.mxu0 %v426
    %453 = vmatpush.msra.mxu0 %v425
    %454 = vmatpush.msra.mxu0 %v424
    %455 = vmatpush.msra.mxu0 %v423
    %456 = vmatpush.msra.mxu0 %v422
    %457 = vmatpush.msra.mxu0 %v421
    %458 = vmatpush.msra.mxu0 %v420
    %459 = vmatmul.f32.gmra.mxu0 %v441
    %v460 = vpop.f32.mrf.mxu0
    %v461 = vadd.f32 %v438, %v460
    %462 = vdwg.mxu0
    %vm463 = vcmp.eq.s32.totalorder %v428, 1
    %v464 = vsel %vm463, 1, 0
    %v465 = vcvt.s32.f32 %v464
    %v466 = vmul.f32 %v403, %v465
    %v467 = vsel %vm404, %v466, 0.0
    %468 = vadd.xlane.f32.xlu0 %v467
    %v469 = vpop.xlane.xlu0 %468
    %v470 = vld [vmem:[%s4 + $0x1] sm:$0x1]
    %v471 = vperm.slane %v470, 0
    %v472 = vmul.f32 %v469, %v471
    %v473 = vadd.f32 %v461, %v472
    %v474 = vrcp.pop %v408
    %v475 = vmul.f32 %v408, %v474
    %v476 = vsub.f32 1.0, %v475
    %v477 = vmul.f32 %v474, %v476
    %v478 = vadd.f32 %v474, %v477
    %vm479 = vweird.f32 %v408
    %vm480 = vweird.f32 %v474
    %vm481 = vmor %vm479, %vm480
    %v482 = vsel %vm481, %v474, %v478
    %v483 = vand.u32 2147483647, %v408
    %vm484 = vcmp.eq.f32.partialorder %v483, 8.507059e+37
    %v485 = vand.u32 %v408, 2147483648
    %v486 = vor.u32 1.1754944e-38, %v485
    %v487 = vsel %vm484, %v486, %v482
    %v488 = vmul.f32 %v473, %v487
    %v489 = vpack.c.bf16 %v488, %v488
    %v490 = vld [vmem:[%s5] sm:$0xf]
    %v491 = vld [vmem:[%s5 + $0x4] sm:$0xf]
    %v492 = vld [vmem:[%s5 + $0x8] sm:$0xf]
    %v493 = vld [vmem:[%s5 + $0xc] sm:$0xf]
    %v494 = vld [vmem:[%s6] sm:$0x1]
    %v496 = vperm.slane %v494, 0
    %v502 = vunpack.c.l.b16 %v490
    %v503 = vunpack.c.l.b16 %v491
    %v504 = vunpack.c.l.b16 %v492
    %v505 = vunpack.c.l.b16 %v493
    %v506 = vpack.c.b16 %v503, %v502
    %v507 = vpack.c.b16 %v505, %v504
    %vm510 = vcmask 261120
    %v512 = vsel %vm510, %v489, 0
    %514 = vmatpush.bf16.msra.mxu0 0
    %515 = vmatpush.bf16.msra.mxu0 0
    %516 = vmatpush.bf16.msra.mxu0 0
    %517 = vmatpush.bf16.msra.mxu0 0
    %518 = vmatpush.bf16.msra.mxu0 0
    %519 = vmatpush.bf16.msra.mxu0 0
    %520 = vmatpush.bf16.msra.mxu0 %v507
    %521 = vmatpush.bf16.msra.mxu0 %v506
    %522 = vmatmul.bf16.gmra.mxu0 %v512
    %v523 = vpop.f32.mrf.mxu0
    %v524 = vadd.f32 %v496, %v523
    %v525 = vpop.f32.mrf.mxu0
    %526 = vdwg.mxu0
    %v527 = vtanh.pop %v524
    %v528 = vpack.c.bf16 %v527, %v527
    %v529 = vld [vmem:[%s7] sm:$0xf]
    %v530 = vld [vmem:[%s7 + $0x4] sm:$0xf]
    %v531 = vld [vmem:[%s7 + $0x8] sm:$0xf]
    %v532 = vld [vmem:[%s7 + $0xc] sm:$0xf]
    %v533 = vld [vmem:[%s8] sm:$0x1]
    %v535 = vperm.slane %v533, 0
    %v541 = vunpack.c.l.b16 %v529
    %v542 = vunpack.c.l.b16 %v530
    %v543 = vunpack.c.l.b16 %v531
    %v544 = vunpack.c.l.b16 %v532
    %v545 = vpack.c.b16 %v542, %v541
    %v546 = vpack.c.b16 %v544, %v543
    %v550 = vsel %vm510, %v528, 0
    %552 = vmatpush.bf16.msra.mxu0 0
    %553 = vmatpush.bf16.msra.mxu0 0
    %554 = vmatpush.bf16.msra.mxu0 0
    %555 = vmatpush.bf16.msra.mxu0 0
    %556 = vmatpush.bf16.msra.mxu0 0
    %557 = vmatpush.bf16.msra.mxu0 0
    %558 = vmatpush.bf16.msra.mxu0 %v546
    %559 = vmatpush.bf16.msra.mxu0 %v545
    %560 = vmatmul.bf16.gmra.mxu0 %v550
    %v561 = vpop.f32.mrf.mxu0
    %v562 = vadd.f32 %v535, %v561
    %v563 = vpop.f32.mrf.mxu0
    %564 = vdwg.mxu0
    %565 = vst [vmem:[#allocation6] sm:$0xff] %v562
    // Predicated region
    $region311: #{tpu_custom_call.1} parent=1 // pred_check
      _
    $region312: #{tpu_custom_call.1} parent=1 // pred_check_branch
      %567 = sbr.rel (0) target = $region314
    $region313: #{tpu_custom_call.1} parent=1 // pred_region
      %569 = vsyncadd [#allocation7], 0
      %s571 = sshll.u32 [#allocation6], 4
      %s572 = int_to_ptr.vmem [resolvable:$true] %s571
      %s573 = sshll.u32 %s9, 4
      %s574 = int_to_ptr.hbm [resolvable:$true] %s573
      %576 = dma.vmem_to_hbm [thread:$0]  %s572, 128, %s574, [#allocation7]
    $region314: #{tpu_custom_call.1} parent=1 // pred_fallthru
      _
    // Predicated region
    $region315: #{tpu_custom_call.1} parent=1 // pred_check
      _
    $region316: #{tpu_custom_call.1} parent=1 // pred_check_branch
      %578 = sbr.rel (0) target = $region318
    $region317: #{tpu_custom_call.1} parent=1 // pred_region
      %580 = dma.done [#allocation7], 128
    $region318: #{tpu_custom_call.1} parent=1 // pred_fallthru
      _
    %581 = vsyncpa [#allocation7], 1
  %582 = vsyncmov [#allocation3]
  %s583 = vpop.sfrf %582
  %p584 = scmp.eq.s32.totalorder %s583, 0
  %p585 = pneg %p584
  %587 = shalt.err (%p585)

</llo_original>
